<compile_context>
chip_gen: v7x
topology: tpu7x:2x2x1
jax: 0.10.0
libtpu: 0.0.40
codegen_flags: <defaults>
</compile_context>

<pallas_src>
import jax
import jax.numpy as jnp
from jax.experimental import pallas as pl
from jax.experimental.pallas import tpu as pltpu


def _fc_relu_kernel(x_ref, wt_ref, b_ref, o_ref):
    # x: [TB, V], wt: [V, H] (already transposed on host), b: [1, H]
    y = jnp.dot(x_ref[...], wt_ref[...], preferred_element_type=jnp.float32)
    y = y + b_ref[...].astype(jnp.float32)
    o_ref[...] = jnp.maximum(y, 0.0).astype(o_ref.dtype)


def fc_layer_forward(emb, weight, bias, *, block_b=None):
    """
    emb:    [B, vocab_dim]
    weight: [fc_hidden_dim, vocab_dim]   (PyTorch nn.Linear convention)
    bias:   [fc_hidden_dim]
    returns fc_out: [B, fc_hidden_dim] = ReLU(emb @ weight.T + bias)
    """
    B, V = emb.shape
    H = weight.shape[0]

    # One-time host-side pre-transpose: kernel sees [V, H], no XLU relayout per step.
    w_t = jnp.transpose(weight)          # [V, H]
    b2d = bias.reshape(1, H)             # 2-D, lane-dense on H

    # Batch tile: full batch when small, 128 rows otherwise (fits VMEM budget on
    # v5e/v6e/v7x with large headroom; raise toward 256 on v6e/v7x if desired).
    if block_b is None:
        block_b = B if B <= 128 else 128

    # Pad batch so it divides evenly into tiles (padded rows computed then sliced off).
    n_tiles = pl.cdiv(B, block_b)
    Bp = n_tiles * block_b
    x = emb if Bp == B else jnp.pad(emb, ((0, Bp - B), (0, 0)))

    cost = pl.CostEstimate(
        flops=2 * Bp * V * H,
        transcendentals=0,
        bytes_accessed=(Bp * V + V * H + H + Bp * H) * emb.dtype.itemsize,
    )

    grid_spec = pl.GridSpec(
        grid=(n_tiles,),
        in_specs=[
            pl.BlockSpec((block_b, V), lambda i: (i, 0)),   # x: tiled over batch
            pl.BlockSpec((V, H), lambda i: (0, 0)),          # w_t: resident
            pl.BlockSpec((1, H), lambda i: (0, 0)),          # bias: resident
        ],
        out_specs=pl.BlockSpec((block_b, H), lambda i: (i, 0)),
    )

    out = pl.pallas_call(
        _fc_relu_kernel,
        out_shape=jax.ShapeDtypeStruct((Bp, H), emb.dtype),
        grid_spec=grid_spec,
        compiler_params=pltpu.CompilerParams(
            dimension_semantics=("parallel",)),
        cost_estimate=cost,
    )(x, w_t, b2d)

    return out if Bp == B else out[:B]


def _reference_forward(emb, weight, bias):
    return jax.nn.relu(emb @ weight.T + bias)


if __name__ == "__main__":
    # Small shapes consistent with the module: batch=2, vocab_dim=32, fc_hidden_dim=32
    B, V, H = 2, 32, 32

    key = jax.random.PRNGKey(0)
    k_x, k_w, k_b = jax.random.split(key, 3)

    emb = jax.random.normal(k_x, (B, V), dtype=jnp.float32)

    # nn.Linear-style init: W [H, V], b [H]
    bound = 1.0 / (V ** 0.5)
    weight = jax.random.uniform(k_w, (H, V), jnp.float32, -bound, bound)
    bias = jax.random.uniform(k_b, (H,), jnp.float32, -bound, bound)

    fc_out = fc_layer_forward(emb, weight, bias)
    jax.block_until_ready(fc_out)

    ref = _reference_forward(emb, weight, bias)
    assert fc_out.shape == (B, H)
    assert jnp.allclose(fc_out, ref, atol=1e-5, rtol=1e-5)

    print("KERNEL_OK")
</pallas_src>

<mosaic_0001>
module attributes {stable_mosaic.version = 11 : i64} {
  func.func @_fc_relu_kernel(%arg0: i32, %arg1: memref<2x32xf32, #tpu.memory_space<vmem>>, %arg2: memref<32x32xf32, #tpu.memory_space<vmem>>, %arg3: memref<1x32xf32, #tpu.memory_space<vmem>>, %arg4: memref<2x32xf32, #tpu.memory_space<vmem>>) attributes {dimension_semantics = [#tpu.dimension_semantics<parallel>], iteration_bounds = array<i64: 1>, scalar_prefetch = 0 : i64, scratch_operands = 0 : i64, tpu.core_type = #tpu.core_type<tc>, window_params = [{transform_indices = @transform_0, window_bounds = array<i64: 2, 32>}, {pipeline_mode = #tpu.pipeline_mode<synchronous>, transform_indices = @transform_1, window_bounds = array<i64: 32, 32>}, {pipeline_mode = #tpu.pipeline_mode<synchronous>, transform_indices = @transform_2, window_bounds = array<i64: 1, 32>}, {transform_indices = @transform_3, window_bounds = array<i64: 2, 32>}]} {
    %c0 = arith.constant 0 : index
    %c0_0 = arith.constant 0 : index
    %0 = vector.load %arg1[%c0, %c0_0] : memref<2x32xf32, #tpu.memory_space<vmem>>, vector<2x32xf32>
    %c0_1 = arith.constant 0 : index
    %c0_2 = arith.constant 0 : index
    %1 = vector.load %arg2[%c0_1, %c0_2] : memref<32x32xf32, #tpu.memory_space<vmem>>, vector<32x32xf32>
    %cst = arith.constant dense<0.000000e+00> : vector<2x32xf32>
    %2 = tpu.matmul %0, %1, %cst {dimension_numbers = #tpu.dot_dimension_numbers<[1], [0], [0], [1], [0, 0, 1, 1], [], []>} : vector<2x32xf32>, vector<32x32xf32>, vector<2x32xf32> -> vector<2x32xf32>
    %c0_3 = arith.constant 0 : index
    %c0_4 = arith.constant 0 : index
    %3 = vector.load %arg3[%c0_3, %c0_4] : memref<1x32xf32, #tpu.memory_space<vmem>>, vector<1x32xf32>
    %4 = vector.broadcast %3 : vector<1x32xf32> to vector<2x32xf32>
    %5 = arith.addf %2, %4 : vector<2x32xf32>
    %cst_5 = arith.constant 0.000000e+00 : f32
    %6 = vector.broadcast %cst_5 : f32 to vector<2x32xf32>
    %7 = arith.maximumf %5, %6 : vector<2x32xf32>
    %c0_6 = arith.constant 0 : index
    %c0_7 = arith.constant 0 : index
    %8 = vector.load %arg4[%c0_6, %c0_7] : memref<2x32xf32, #tpu.memory_space<vmem>>, vector<2x32xf32>
    tpu.vector_store %arg4[%c0_6, %c0_7], %7 {strides = array<i32>} : memref<2x32xf32, #tpu.memory_space<vmem>>, vector<2x32xf32>,
    return
  }
  func.func @transform_0(%arg0: i32) -> (i32, i32) {
    %c0_i32 = arith.constant 0 : i32
    %c0_i32_0 = arith.constant 0 : i32
    return %arg0, %c0_i32 : i32, i32
  }
  func.func @transform_1(%arg0: i32) -> (i32, i32) {
    %c0_i32 = arith.constant 0 : i32
    %c0_i32_0 = arith.constant 0 : i32
    %c0_i32_1 = arith.constant 0 : i32
    return %c0_i32, %c0_i32_0 : i32, i32
  }
  func.func @transform_2(%arg0: i32) -> (i32, i32) {
    %c0_i32 = arith.constant 0 : i32
    %c0_i32_0 = arith.constant 0 : i32
    %c0_i32_1 = arith.constant 0 : i32
    return %c0_i32, %c0_i32_0 : i32, i32
  }
  func.func @transform_3(%arg0: i32) -> (i32, i32) {
    %c0_i32 = arith.constant 0 : i32
    %c0_i32_0 = arith.constant 0 : i32
    return %arg0, %c0_i32 : i32, i32
  }
}

</mosaic_0001>

<llo_original>
// kernel: tpu_custom_call.1
$region0: #{tpu_custom_call.1}
  #allocation0 [shape = 'u32[]', space=smem, size = 0x4, offset = 0x4, fixed_abs, tag = 'smem constant byte address 0x4 - core index']
  #allocation1 [shape = 'u32[144,128]{1,0:T(1,128)}', space=vmem, size = 0x12000, scoped, tag = 'internal scratch']
  %s0 = inlined_call_operand.hbm [shape: f32[2,32], index: 0, kind: input, shape index: {}]
  %s1 = inlined_call_operand.hbm [shape: f32[32,32], index: 1, kind: input, shape index: {}]
  %s2 = inlined_call_operand.vmem [shape: f32[1,32], index: 2, kind: input, shape index: {}]
  %s3 = inlined_call_operand.hbm [shape: f32[2,32], index: 3, kind: output, shape index: {}]
  %s4 = sld [smem:[#allocation0]]
  $region30: #{tpu_custom_call.1} parent=0
    _
  %s6 = ssub.s32 1, %s4
  %s7 = scalar_select 0, %s6, %s4
  $region1: #{tpu_custom_call.1} parent=0
    #allocation2 [shape = 'u8[1024]{0}', space=vmem, size = 0x400, scoped, tag = 'input window, operand 0, single buffered']
    #allocation3 [shape = 's32[1]{0}', space=sflag, size = 0x4, scoped, tag = 'scoped memory for tpu_custom_call.1']
    #allocation4 [shape = 's32[1]{0}', space=sflag, size = 0x4, scoped, tag = 'scoped memory for tpu_custom_call.1']
    #allocation5 [shape = 'u8[16384]{0}', space=vmem, size = 0x4000, scoped, tag = 'input window, operand 1, single buffered']
    #allocation6 [shape = 's32[1]{0}', space=sflag, size = 0x4, scoped, tag = 'scoped memory for tpu_custom_call.1']
    #allocation7 [shape = 'u8[1024]{0}', space=vmem, size = 0x400, scoped, tag = 'output window, operand 0, single buffered']
    %8 = vsyncpa [#allocation3], 0
    %9 = vsyncpa [#allocation6], 0
    %10 = vsyncpa [#allocation4], 0
    // Predicated region
    $region2: #{tpu_custom_call.1} parent=1 // pred_check
      _
    $region3: #{tpu_custom_call.1} parent=1 // pred_check_branch
      %12 = sbr.rel (0) target = $region5
    $region4: #{tpu_custom_call.1} parent=1 // pred_region
      %s14 = ssub.s32 32, 32
      %15 = vsyncadd [#allocation3], %s14
      %s17 = sshll.u32 [#allocation2], 4
      %s18 = int_to_ptr.vmem [resolvable:$true] %s17
      %20 = dma.hbm_to_vmem [thread:$0]  %s0, 32, %s18, [#allocation3]
    $region5: #{tpu_custom_call.1} parent=1 // pred_fallthru
      _
    // Predicated region
    $region6: #{tpu_custom_call.1} parent=1 // pred_check
      _
    $region7: #{tpu_custom_call.1} parent=1 // pred_check_branch
      %22 = sbr.rel (0) target = $region9
    $region8: #{tpu_custom_call.1} parent=1 // pred_region
      %s24 = ssub.s32 512, 512
      %25 = vsyncadd [#allocation6], %s24
      %s26 = sshll.u32 [#allocation5], 4
      %s27 = int_to_ptr.vmem [resolvable:$true] %s26
      %32 = dma.hbm_to_vmem [thread:$0]  %s1, 512, %s27, [#allocation6], 128, 128, 8
    $region9: #{tpu_custom_call.1} parent=1 // pred_fallthru
      _
    // Predicated region
    $region10: #{tpu_custom_call.1} parent=1 // pred_check
      _
    $region11: #{tpu_custom_call.1} parent=1 // pred_check_branch
      %34 = sbr.rel (0) target = $region13
    $region12: #{tpu_custom_call.1} parent=1 // pred_region
      _
    $region13: #{tpu_custom_call.1} parent=1 // pred_fallthru
      _
    // Predicated region
    $region14: #{tpu_custom_call.1} parent=1 // pred_check
      _
    $region15: #{tpu_custom_call.1} parent=1 // pred_check_branch
      %36 = sbr.rel (0) target = $region17
    $region16: #{tpu_custom_call.1} parent=1 // pred_region
      %37 = dma.done [#allocation3], 32
    $region17: #{tpu_custom_call.1} parent=1 // pred_fallthru
      _
    // Predicated region
    $region18: #{tpu_custom_call.1} parent=1 // pred_check
      _
    $region19: #{tpu_custom_call.1} parent=1 // pred_check_branch
      %39 = sbr.rel (0) target = $region21
    $region20: #{tpu_custom_call.1} parent=1 // pred_region
      %40 = dma.done [#allocation6], 512
    $region21: #{tpu_custom_call.1} parent=1 // pred_fallthru
      _
    %v41 = vld [vmem:[#allocation2] sm:$0x3]
    %v42 = vld [vmem:[#allocation5] sm:$0xff]
    %v43 = vld [vmem:[#allocation5 + $0x8] sm:$0xff]
    %v44 = vld [vmem:[#allocation5 + $0x10] sm:$0xff]
    %v45 = vld [vmem:[#allocation5 + $0x18] sm:$0xff]
    %v46 = vld [vmem:[%s2] sm:$0x1]
    %v48 = vlaneseq
    %v49 = vshrl.u32 %v48, 7
    %v50 = vsub.s32 0, %v49
    %v51 = vrot.slane %v46, %v50
    %vm53 = vcmask 261120
    %v55 = vsel %vm53, %v41, 0
    %57 = vmatprep.subr.mxu0 0.0
    %58 = vmatpush1.msra.mxu0 %v42
    %59 = vmatprep.subr.mxu0 0.0
    %60 = vmatpush1.msra.mxu0 %v43
    %61 = vmatprep.subr.mxu0 0.0
    %62 = vmatpush1.msra.mxu0 %v44
    %63 = vmatprep.subr.mxu0 0.0
    %64 = vmatpush1.msra.mxu0 %v45
    %65 = vmatprep.subr.mxu0 0.0
    %66 = vmatpush1.msra.mxu0 0.0
    %67 = vmatprep.subr.mxu0 0.0
    %68 = vmatpush1.msra.mxu0 0.0
    %69 = vmatprep.subr.mxu0 0.0
    %70 = vmatpush1.msra.mxu0 0.0
    %71 = vmatprep.subr.mxu0 0.0
    %72 = vmatpush1.msra.mxu0 0.0
    %73 = vmatprep.subr.mxu0 0.0
    %74 = vmatpush1.msra.mxu0 0.0
    %75 = vmatprep.subr.mxu0 0.0
    %76 = vmatpush1.msra.mxu0 0.0
    %77 = vmatprep.subr.mxu0 0.0
    %78 = vmatpush1.msra.mxu0 0.0
    %79 = vmatprep.subr.mxu0 0.0
    %80 = vmatpush1.msra.mxu0 0.0
    %81 = vmatprep.subr.mxu0 0.0
    %82 = vmatpush1.msra.mxu0 0.0
    %83 = vmatprep.subr.mxu0 0.0
    %84 = vmatpush1.msra.mxu0 0.0
    %85 = vmatprep.subr.mxu0 0.0
    %86 = vmatpush1.msra.mxu0 0.0
    %87 = vmatprep.subr.mxu0 0.0
    %88 = vmatpush1.msra.mxu0 0.0
    %89 = vmatprep.subr.mxu0 0.0
    %90 = vmatpush1.msra.mxu0 0.0
    %91 = vmatprep.subr.mxu0 0.0
    %92 = vmatpush1.msra.mxu0 0.0
    %93 = vmatprep.subr.mxu0 0.0
    %94 = vmatpush1.msra.mxu0 0.0
    %95 = vmatprep.subr.mxu0 0.0
    %96 = vmatpush1.msra.mxu0 0.0
    %97 = vmatprep.subr.mxu0 0.0
    %98 = vmatpush1.msra.mxu0 0.0
    %99 = vmatprep.subr.mxu0 0.0
    %100 = vmatpush1.msra.mxu0 0.0
    %101 = vmatprep.subr.mxu0 0.0
    %102 = vmatpush1.msra.mxu0 0.0
    %103 = vmatprep.subr.mxu0 0.0
    %104 = vmatpush1.msra.mxu0 0.0
    %105 = vmatprep.subr.mxu0 0.0
    %106 = vmatpush1.msra.mxu0 0.0
    %107 = vmatprep.subr.mxu0 0.0
    %108 = vmatpush1.msra.mxu0 0.0
    %109 = vmatprep.subr.mxu0 0.0
    %110 = vmatpush1.msra.mxu0 0.0
    %111 = vmatprep.subr.mxu0 0.0
    %112 = vmatpush1.msra.mxu0 0.0
    %113 = vmatprep.subr.mxu0 0.0
    %114 = vmatpush1.msra.mxu0 0.0
    %115 = vmatprep.subr.mxu0 0.0
    %116 = vmatpush1.msra.mxu0 0.0
    %117 = vmatprep.subr.mxu0 0.0
    %118 = vmatpush1.msra.mxu0 0.0
    %119 = vmatprep.subr.mxu0 0.0
    %120 = vmatpush1.msra.mxu0 0.0
    %121 = vmatprep.mubr.f32.mxu0 0.0
    %122 = vmatmul.mubr.f32.gmra.mrb[0].mxu0 %v55
    %v123 = vpop.f32.mrb[0].mxu0
    %v124 = vadd.f32 %v51, %v123
    %v125 = vpop.f32.mrb[0].mxu0
    %126 = vdwg.mxu0
    %v127 = vmax.f32 %v124, 0.0
    %vm128 = vcmask 254976
    %129 = vst.msk [vmem:[#allocation7] sm:$0x3] %vm128, %v127
    // Predicated region
    $region22: #{tpu_custom_call.1} parent=1 // pred_check
      _
    $region23: #{tpu_custom_call.1} parent=1 // pred_check_branch
      %131 = sbr.rel (0) target = $region25
    $region24: #{tpu_custom_call.1} parent=1 // pred_region
      %s133 = ssub.s32 32, 32
      %134 = vsyncadd [#allocation4], %s133
      %s136 = sshll.u32 [#allocation7], 4
      %s137 = int_to_ptr.vmem [resolvable:$true] %s136
      %139 = dma.vmem_to_hbm [thread:$0]  %s137, 32, %s3, [#allocation4]
    $region25: #{tpu_custom_call.1} parent=1 // pred_fallthru
      _
    // Predicated region
    $region26: #{tpu_custom_call.1} parent=1 // pred_check
      _
    $region27: #{tpu_custom_call.1} parent=1 // pred_check_branch
      %141 = sbr.rel (0) target = $region29
    $region28: #{tpu_custom_call.1} parent=1 // pred_region
      %142 = dma.done [#allocation4], 32
    $region29: #{tpu_custom_call.1} parent=1 // pred_fallthru
      _
    %143 = vsyncpa [#allocation3], 1
    %144 = vsyncpa [#allocation6], 1
    %145 = vsyncpa [#allocation4], 1

</llo_original>
